<compile_context>
chip_gen: v7x
topology: tpu7x:2x2x1
jax: 0.10.0
libtpu: 0.0.40
codegen_flags: <defaults>
</compile_context>

<pallas_src>
import functools

import jax
import jax.numpy as jnp
from jax.experimental import pallas as pl
from jax.experimental.pallas import tpu as pltpu

B = 2           # batch
C = 4           # input channels
H = W = 16      # spatial
HW = H * W
D = 32          # hidden dim
NQ = 8          # number of object queries
NC = 9          # number of classes (matches class_names dict in Inferencer)
NUM_TOP = 4     # num_top_queries in the deploy postprocessor (small for demo)
HEAD = 128      # lane-dense padded head width: [0:NC]=scores, [NC:NC+4]=boxes, rest 0


def _detr_kernel(bb,                                          # python const: batch per grid step
                 orig_ref,                                    # SMEM (B, 2) int32, scalar-prefetch
                 x_ref, w1t_ref, qemb_ref, whead_ref, m128_ref,
                 out_ref):
    base = pl.program_id(0) * bb

    w1t = w1t_ref[...]            # (D, C)
    qemb = qemb_ref[...]          # (NQ, D)
    whead = whead_ref[...]        # (D, HEAD)   cols [0:NC]=wcls, [NC:NC+4]=wbox, rest 0
    m128 = m128_ref[...]          # (HEAD, HEAD) identity on score lanes, cxcywh->xyxy on box lanes

    # Hoisted lane masks for the per-image (w, h, w, h) scaling of box lanes.
    col = jax.lax.broadcasted_iota(jnp.int32, (NQ, HEAD), 1)
    in_box = jnp.logical_and(col >= NC, col < NC + 4)
    box_even = ((col - NC) % 2) == 0

    for i in range(bb):           # bb is tiny (<= B); statically unrolled
        x = x_ref[i]                                                             # (C, HW)

        # backbone stub: 1x1 conv == channel matmul, + ReLU (HW on lanes)
        featT = jnp.maximum(
            jnp.dot(w1t, x, preferred_element_type=jnp.float32), 0.0)            # (D, HW)

        # decoder stub: query cross-attention over the HW spatial positions
        s = jnp.dot(qemb, featT, preferred_element_type=jnp.float32)             # (NQ, HW)
        s = s - jnp.max(s, axis=-1, keepdims=True)
        p = jnp.exp(s)                                                           # EUP
        attn = p * pl.reciprocal(jnp.sum(p, axis=-1, keepdims=True), approx=True)

        # qfeat = attn @ featT^T  (single small non-canonical contraction)
        qfeat = jax.lax.dot_general(
            attn, featT, (((1,), (1,)), ((), ())),
            preferred_element_type=jnp.float32)                                  # (NQ, D)

        # fused class+box head, lane-dense width 128
        raw = jnp.dot(qfeat, whead, preferred_element_type=jnp.float32)          # (NQ, HEAD)
        sig = pl.reciprocal(1.0 + jnp.exp(-raw), approx=True)                    # sigmoid via EUP

        # scores pass through; box lanes get cxcywh->xyxy; pad lanes -> 0
        slab = jnp.dot(sig, m128, preferred_element_type=jnp.float32)            # (NQ, HEAD)

        # scale box lanes by original image size (w, h, w, h); score lanes by 1
        ow = orig_ref[base + i, 0].astype(jnp.float32)
        oh = orig_ref[base + i, 1].astype(jnp.float32)
        scale = jnp.where(in_box, jnp.where(box_even, ow, oh), 1.0)
        out_ref[i] = slab * scale                                                # (NQ, HEAD)


def init_params(key):
    k1, k2, k3, k4 = jax.random.split(key, 4)
    w1 = jax.random.normal(k1, (C, D), jnp.float32) * 0.1
    qemb = jax.random.normal(k2, (NQ, D), jnp.float32) * 0.1
    wcls = jax.random.normal(k3, (D, NC), jnp.float32) * 0.1
    wbox = jax.random.normal(k4, (D, 4), jnp.float32) * 0.1
    return w1, qemb, wcls, wbox


def rtdetr_infer(images_nchw, orig_sizes, params, *, batch_block=None):
    """images_nchw: (B, C, H, W) f32; orig_sizes: (B, 2) int32 = (width, height).

    Returns (labels, boxes, scores) like the RT-DETR deploy postprocessor.
    batch_block: images per grid step.  Default = B (single fused grid step;
    best on single-TC v5e/v6e).  Use batch_block=1 on v7x to shard the batch
    across its 2 TensorCores via the "parallel" grid axis.
    """
    w1, qemb, wcls, wbox = params
    bb = B if batch_block is None else batch_block
    assert B % bb == 0

    # (B, C, H, W) -> (B, C, HW): pure reshape, no transpose / extra HBM pass.
    x = images_nchw.reshape(B, C, HW)

    # One-time parameter packing (layout plumbing, outside the kernel).
    w1t = jnp.transpose(w1)                                        # (D, C)
    whead = jnp.zeros((D, HEAD), jnp.float32)
    whead = whead.at[:, :NC].set(wcls).at[:, NC:NC + 4].set(wbox)  # (D, 128)

    m_convert = jnp.array([[1.0, 0.0, 1.0, 0.0],
                           [0.0, 1.0, 0.0, 1.0],
                           [-0.5, 0.0, 0.5, 0.0],
                           [0.0, -0.5, 0.0, 0.5]], dtype=jnp.float32)
    m128 = jnp.zeros((HEAD, HEAD), jnp.float32)
    m128 = m128.at[:NC, :NC].set(jnp.eye(NC, dtype=jnp.float32))
    m128 = m128.at[NC:NC + 4, NC:NC + 4].set(m_convert)            # (128, 128)

    grid_spec = pltpu.PrefetchScalarGridSpec(
        num_scalar_prefetch=1,
        grid=(B // bb,),
        in_specs=[
            pl.BlockSpec((bb, C, HW), lambda g, o: (g, 0, 0)),     # images (C, HW per item)
            pl.BlockSpec((D, C), lambda g, o: (0, 0)),             # backbone weight (transposed)
            pl.BlockSpec((NQ, D), lambda g, o: (0, 0)),            # query embeddings
            pl.BlockSpec((D, HEAD), lambda g, o: (0, 0)),          # fused class+box head (padded)
            pl.BlockSpec((HEAD, HEAD), lambda g, o: (0, 0)),       # score-identity / cxcywh->xyxy map
        ],
        out_specs=pl.BlockSpec((bb, NQ, HEAD), lambda g, o: (g, 0, 0)),
    )

    slab = pl.pallas_call(
        functools.partial(_detr_kernel, bb),
        out_shape=jax.ShapeDtypeStruct((B, NQ, HEAD), jnp.float32),
        grid_spec=grid_spec,
        compiler_params=pltpu.CompilerParams(
            dimension_semantics=("parallel",)),
    )(orig_sizes, x, w1t, qemb, whead, m128)

    scores = slab[:, :, :NC]                 # per-query sigmoid scores
    boxes = slab[:, :, NC:NC + 4]            # per-query xyxy boxes, scaled to original size

    # Deploy postprocessor (use_focal_loss=True) top-k over flattened (Q*NC) scores.
    # TODO(synk): top-k / gather left in plain JAX — sort has no clean Pallas TPU equivalent.
    flat = scores.reshape(B, NQ * NC)
    top_scores, top_idx = jax.lax.top_k(flat, NUM_TOP)
    labels = top_idx % NC
    qidx = top_idx // NC
    sel_boxes = jnp.take_along_axis(boxes, qidx[..., None], axis=1)
    return labels, sel_boxes, top_scores


if __name__ == "__main__":
    key = jax.random.PRNGKey(0)
    k_img, k_par = jax.random.split(key)

    images = jax.random.normal(k_img, (B, C, H, W), jnp.float32)       # NCHW like PyTorch
    orig_sizes = jnp.array([[640, 480], [320, 240]], dtype=jnp.int32)  # (width, height) per image
    params = init_params(k_par)

    labels, boxes, scores = rtdetr_infer(images, orig_sizes, params)
    jax.block_until_ready((labels, boxes, scores))

    assert labels.shape == (B, NUM_TOP)
    assert boxes.shape == (B, NUM_TOP, 4)
    assert scores.shape == (B, NUM_TOP)
    print("KERNEL_OK")
</pallas_src>

<mosaic_0001>
module attributes {stable_mosaic.version = 11 : i64} {
  func.func @_detr_kernel(%arg0: i32, %arg1: memref<2x2xi32, #tpu.memory_space<smem>>, %arg2: memref<2x4x256xf32, #tpu.memory_space<vmem>>, %arg3: memref<32x4xf32, #tpu.memory_space<vmem>>, %arg4: memref<8x32xf32, #tpu.memory_space<vmem>>, %arg5: memref<32x128xf32, #tpu.memory_space<vmem>>, %arg6: memref<128x128xf32, #tpu.memory_space<vmem>>, %arg7: memref<2x8x128xf32, #tpu.memory_space<vmem>>) attributes {dimension_semantics = [#tpu.dimension_semantics<parallel>], iteration_bounds = array<i64: 1>, scalar_prefetch = 1 : i64, scratch_operands = 0 : i64, tpu.core_type = #tpu.core_type<tc>, window_params = [{transform_indices = @transform_0, window_bounds = array<i64: 2, 4, 256>}, {pipeline_mode = #tpu.pipeline_mode<synchronous>, transform_indices = @transform_1, window_bounds = array<i64: 32, 4>}, {pipeline_mode = #tpu.pipeline_mode<synchronous>, transform_indices = @transform_2, window_bounds = array<i64: 8, 32>}, {pipeline_mode = #tpu.pipeline_mode<synchronous>, transform_indices = @transform_3, window_bounds = array<i64: 32, 128>}, {pipeline_mode = #tpu.pipeline_mode<synchronous>, transform_indices = @transform_4, window_bounds = array<i64: 128, 128>}, {transform_indices = @transform_5, window_bounds = array<i64: 2, 8, 128>}]} {
    %c2_i32 = arith.constant 2 : i32
    %0 = arith.muli %arg0, %c2_i32 : i32
    %c0 = arith.constant 0 : index
    %c0_0 = arith.constant 0 : index
    %1 = vector.load %arg3[%c0, %c0_0] : memref<32x4xf32, #tpu.memory_space<vmem>>, vector<32x4xf32>
    %c0_1 = arith.constant 0 : index
    %c0_2 = arith.constant 0 : index
    %2 = vector.load %arg4[%c0_1, %c0_2] : memref<8x32xf32, #tpu.memory_space<vmem>>, vector<8x32xf32>
    %c0_3 = arith.constant 0 : index
    %c0_4 = arith.constant 0 : index
    %3 = vector.load %arg5[%c0_3, %c0_4] : memref<32x128xf32, #tpu.memory_space<vmem>>, vector<32x128xf32>
    %c0_5 = arith.constant 0 : index
    %c0_6 = arith.constant 0 : index
    %4 = vector.load %arg6[%c0_5, %c0_6] : memref<128x128xf32, #tpu.memory_space<vmem>>, vector<128x128xf32>
    %5 = tpu.iota {dimensions = array<i32: 1>} : vector<8x128xi32>
    %c9_i32 = arith.constant 9 : i32
    %6 = vector.broadcast %c9_i32 : i32 to vector<8x128xi32>
    %7 = arith.cmpi sge, %5, %6 : vector<8x128xi32>
    %c13_i32 = arith.constant 13 : i32
    %8 = vector.broadcast %c13_i32 : i32 to vector<8x128xi32>
    %9 = arith.cmpi slt, %5, %8 : vector<8x128xi32>
    %10 = arith.andi %7, %9 : vector<8x128xi1>
    %c9_i32_7 = arith.constant 9 : i32
    %11 = vector.broadcast %c9_i32_7 : i32 to vector<8x128xi32>
    %12 = arith.subi %5, %11 : vector<8x128xi32>
    %c2_i32_8 = arith.constant 2 : i32
    %c0_i32 = arith.constant 0 : i32
    %13 = arith.cmpi eq, %c2_i32_8, %c0_i32 : i32
    %c1_i32 = arith.constant 1 : i32
    %14 = arith.select %13, %c1_i32, %c2_i32_8 : i32
    %15 = vector.broadcast %14 : i32 to vector<8x128xi32>
    %16 = arith.remsi %12, %15 : vector<8x128xi32>
    %c0_i32_9 = arith.constant 0 : i32
    %17 = vector.broadcast %c0_i32_9 : i32 to vector<8x128xi32>
    %18 = arith.cmpi ne, %16, %17 : vector<8x128xi32>
    %c0_i32_10 = arith.constant 0 : i32
    %19 = vector.broadcast %c0_i32_10 : i32 to vector<8x128xi32>
    %20 = arith.cmpi slt, %16, %19 : vector<8x128xi32>
    %c0_i32_11 = arith.constant 0 : i32
    %21 = arith.cmpi slt, %14, %c0_i32_11 : i32
    %22 = vector.broadcast %21 : i1 to vector<8x128xi1>
    %23 = vector.broadcast %22 : vector<8x128xi1> to vector<8x128xi1>
    %24 = arith.xori %20, %23 : vector<8x128xi1>
    %25 = arith.andi %24, %18 : vector<8x128xi1>
    %26 = vector.broadcast %14 : i32 to vector<8x128xi32>
    %27 = arith.addi %16, %26 : vector<8x128xi32>
    %28 = arith.select %25, %27, %16 : vector<8x128xi1>, vector<8x128xi32>
    %c0_i32_12 = arith.constant 0 : i32
    %29 = vector.broadcast %c0_i32_12 : i32 to vector<8x128xi32>
    %30 = arith.cmpi eq, %28, %29 : vector<8x128xi32>
    %c0_13 = arith.constant 0 : index
    %c0_14 = arith.constant 0 : index
    %c0_15 = arith.constant 0 : index
    %31 = vector.load %arg2[%c0_13, %c0_14, %c0_15] : memref<2x4x256xf32, #tpu.memory_space<vmem>>, vector<1x4x256xf32>
    %32 = vector.shape_cast %31 : vector<1x4x256xf32> to vector<4x256xf32>
    %cst = arith.constant dense<0.000000e+00> : vector<32x256xf32>
    %33 = tpu.matmul %1, %32, %cst {dimension_numbers = #tpu.dot_dimension_numbers<[1], [0], [0], [1], [0, 0, 1, 1], [], []>} : vector<32x4xf32>, vector<4x256xf32>, vector<32x256xf32> -> vector<32x256xf32>
    %cst_16 = arith.constant 0.000000e+00 : f32
    %34 = vector.broadcast %cst_16 : f32 to vector<32x256xf32>
    %35 = arith.maximumf %33, %34 : vector<32x256xf32>
    %cst_17 = arith.constant dense<0.000000e+00> : vector<8x256xf32>
    %36 = tpu.matmul %2, %35, %cst_17 {dimension_numbers = #tpu.dot_dimension_numbers<[1], [0], [0], [1], [0, 0, 1, 1], [], []>} : vector<8x32xf32>, vector<32x256xf32>, vector<8x256xf32> -> vector<8x256xf32>
    %cst_18 = arith.constant dense<0xFF800000> : vector<8xf32>
    %37 = vector.multi_reduction <maximumf>, %36, %cst_18 [1] : vector<8x256xf32> to vector<8xf32>
    %38 = vector.shape_cast %37 : vector<8xf32> to vector<8x1xf32>
    %39 = vector.broadcast %38 : vector<8x1xf32> to vector<8x256xf32>
    %40 = arith.subf %36, %39 : vector<8x256xf32>
    %41 = math.exp %40 : vector<8x256xf32>
    %cst_19 = arith.constant dense<0.000000e+00> : vector<8xf32>
    %42 = vector.multi_reduction <add>, %41, %cst_19 [1] : vector<8x256xf32> to vector<8xf32>
    %43 = vector.shape_cast %42 : vector<8xf32> to vector<8x1xf32>
    %44 = tpu.reciprocal %43 {approx = true} : vector<8x1xf32> -> vector<8x1xf32>
    %45 = vector.broadcast %44 : vector<8x1xf32> to vector<8x256xf32>
    %46 = arith.mulf %41, %45 : vector<8x256xf32>
    %cst_20 = arith.constant dense<0.000000e+00> : vector<8x32xf32>
    %47 = tpu.matmul %46, %35, %cst_20 {dimension_numbers = #tpu.dot_dimension_numbers<[1], [1], [0], [0], [0, 0, 1, 0], [], []>} : vector<8x256xf32>, vector<32x256xf32>, vector<8x32xf32> -> vector<8x32xf32>
    %cst_21 = arith.constant dense<0.000000e+00> : vector<8x128xf32>
    %48 = tpu.matmul %47, %3, %cst_21 {dimension_numbers = #tpu.dot_dimension_numbers<[1], [0], [0], [1], [0, 0, 1, 1], [], []>} : vector<8x32xf32>, vector<32x128xf32>, vector<8x128xf32> -> vector<8x128xf32>
    %cst_22 = arith.constant 0.000000e+00 : f32
    %49 = vector.broadcast %cst_22 : f32 to vector<8x128xf32>
    %50 = arith.subf %49, %48 : vector<8x128xf32>
    %51 = math.exp %50 : vector<8x128xf32>
    %cst_23 = arith.constant 1.000000e+00 : f32
    %52 = vector.broadcast %cst_23 : f32 to vector<8x128xf32>
    %53 = arith.addf %52, %51 : vector<8x128xf32>
    %54 = tpu.reciprocal %53 {approx = true} : vector<8x128xf32> -> vector<8x128xf32>
    %cst_24 = arith.constant dense<0.000000e+00> : vector<8x128xf32>
    %55 = tpu.matmul %54, %4, %cst_24 {dimension_numbers = #tpu.dot_dimension_numbers<[1], [0], [0], [1], [0, 0, 1, 1], [], []>} : vector<8x128xf32>, vector<128x128xf32>, vector<8x128xf32> -> vector<8x128xf32>
    %c0_i32_25 = arith.constant 0 : i32
    %56 = arith.addi %0, %c0_i32_25 : i32
    %57 = arith.index_cast %56 : i32 to index
    %c0_26 = arith.constant 0 : index
    %58 = memref.load %arg1[%57, %c0_26] : memref<2x2xi32, #tpu.memory_space<smem>>
    %59 = arith.sitofp %58 : i32 to f32
    %c0_i32_27 = arith.constant 0 : i32
    %60 = arith.addi %0, %c0_i32_27 : i32
    %61 = arith.index_cast %60 : i32 to index
    %c1 = arith.constant 1 : index
    %62 = memref.load %arg1[%61, %c1] : memref<2x2xi32, #tpu.memory_space<smem>>
    %63 = arith.sitofp %62 : i32 to f32
    %64 = vector.broadcast %59 : f32 to vector<8x128xf32>
    %65 = vector.broadcast %63 : f32 to vector<8x128xf32>
    %66 = arith.select %30, %64, %65 : vector<8x128xi1>, vector<8x128xf32>
    %cst_28 = arith.constant 1.000000e+00 : f32
    %67 = vector.broadcast %cst_28 : f32 to vector<8x128xf32>
    %68 = arith.select %10, %66, %67 : vector<8x128xi1>, vector<8x128xf32>
    %69 = arith.mulf %55, %68 : vector<8x128xf32>
    %c0_29 = arith.constant 0 : index
    %c0_30 = arith.constant 0 : index
    %c0_31 = arith.constant 0 : index
    %70 = vector.load %arg7[%c0_29, %c0_30, %c0_31] : memref<2x8x128xf32, #tpu.memory_space<vmem>>, vector<1x8x128xf32>
    %71 = vector.shape_cast %70 : vector<1x8x128xf32> to vector<8x128xf32>
    %72 = vector.shape_cast %69 : vector<8x128xf32> to vector<1x8x128xf32>
    tpu.vector_store %arg7[%c0_29, %c0_30, %c0_31], %72 {strides = array<i32>} : memref<2x8x128xf32, #tpu.memory_space<vmem>>, vector<1x8x128xf32>,
    %c1_32 = arith.constant 1 : index
    %c0_33 = arith.constant 0 : index
    %c0_34 = arith.constant 0 : index
    %73 = vector.load %arg2[%c1_32, %c0_33, %c0_34] : memref<2x4x256xf32, #tpu.memory_space<vmem>>, vector<1x4x256xf32>
    %74 = vector.shape_cast %73 : vector<1x4x256xf32> to vector<4x256xf32>
    %cst_35 = arith.constant dense<0.000000e+00> : vector<32x256xf32>
    %75 = tpu.matmul %1, %74, %cst_35 {dimension_numbers = #tpu.dot_dimension_numbers<[1], [0], [0], [1], [0, 0, 1, 1], [], []>} : vector<32x4xf32>, vector<4x256xf32>, vector<32x256xf32> -> vector<32x256xf32>
    %cst_36 = arith.constant 0.000000e+00 : f32
    %76 = vector.broadcast %cst_36 : f32 to vector<32x256xf32>
    %77 = arith.maximumf %75, %76 : vector<32x256xf32>
    %cst_37 = arith.constant dense<0.000000e+00> : vector<8x256xf32>
    %78 = tpu.matmul %2, %77, %cst_37 {dimension_numbers = #tpu.dot_dimension_numbers<[1], [0], [0], [1], [0, 0, 1, 1], [], []>} : vector<8x32xf32>, vector<32x256xf32>, vector<8x256xf32> -> vector<8x256xf32>
    %cst_38 = arith.constant dense<0xFF800000> : vector<8xf32>
    %79 = vector.multi_reduction <maximumf>, %78, %cst_38 [1] : vector<8x256xf32> to vector<8xf32>
    %80 = vector.shape_cast %79 : vector<8xf32> to vector<8x1xf32>
    %81 = vector.broadcast %80 : vector<8x1xf32> to vector<8x256xf32>
    %82 = arith.subf %78, %81 : vector<8x256xf32>
    %83 = math.exp %82 : vector<8x256xf32>
    %cst_39 = arith.constant dense<0.000000e+00> : vector<8xf32>
    %84 = vector.multi_reduction <add>, %83, %cst_39 [1] : vector<8x256xf32> to vector<8xf32>
    %85 = vector.shape_cast %84 : vector<8xf32> to vector<8x1xf32>
    %86 = tpu.reciprocal %85 {approx = true} : vector<8x1xf32> -> vector<8x1xf32>
    %87 = vector.broadcast %86 : vector<8x1xf32> to vector<8x256xf32>
    %88 = arith.mulf %83, %87 : vector<8x256xf32>
    %cst_40 = arith.constant dense<0.000000e+00> : vector<8x32xf32>
    %89 = tpu.matmul %88, %77, %cst_40 {dimension_numbers = #tpu.dot_dimension_numbers<[1], [1], [0], [0], [0, 0, 1, 0], [], []>} : vector<8x256xf32>, vector<32x256xf32>, vector<8x32xf32> -> vector<8x32xf32>
    %cst_41 = arith.constant dense<0.000000e+00> : vector<8x128xf32>
    %90 = tpu.matmul %89, %3, %cst_41 {dimension_numbers = #tpu.dot_dimension_numbers<[1], [0], [0], [1], [0, 0, 1, 1], [], []>} : vector<8x32xf32>, vector<32x128xf32>, vector<8x128xf32> -> vector<8x128xf32>
    %cst_42 = arith.constant 0.000000e+00 : f32
    %91 = vector.broadcast %cst_42 : f32 to vector<8x128xf32>
    %92 = arith.subf %91, %90 : vector<8x128xf32>
    %93 = math.exp %92 : vector<8x128xf32>
    %cst_43 = arith.constant 1.000000e+00 : f32
    %94 = vector.broadcast %cst_43 : f32 to vector<8x128xf32>
    %95 = arith.addf %94, %93 : vector<8x128xf32>
    %96 = tpu.reciprocal %95 {approx = true} : vector<8x128xf32> -> vector<8x128xf32>
    %cst_44 = arith.constant dense<0.000000e+00> : vector<8x128xf32>
    %97 = tpu.matmul %96, %4, %cst_44 {dimension_numbers = #tpu.dot_dimension_numbers<[1], [0], [0], [1], [0, 0, 1, 1], [], []>} : vector<8x128xf32>, vector<128x128xf32>, vector<8x128xf32> -> vector<8x128xf32>
    %c1_i32_45 = arith.constant 1 : i32
    %98 = arith.addi %0, %c1_i32_45 : i32
    %99 = arith.index_cast %98 : i32 to index
    %c0_46 = arith.constant 0 : index
    %100 = memref.load %arg1[%99, %c0_46] : memref<2x2xi32, #tpu.memory_space<smem>>
    %101 = arith.sitofp %100 : i32 to f32
    %c1_i32_47 = arith.constant 1 : i32
    %102 = arith.addi %0, %c1_i32_47 : i32
    %103 = arith.index_cast %102 : i32 to index
    %c1_48 = arith.constant 1 : index
    %104 = memref.load %arg1[%103, %c1_48] : memref<2x2xi32, #tpu.memory_space<smem>>
    %105 = arith.sitofp %104 : i32 to f32
    %106 = vector.broadcast %101 : f32 to vector<8x128xf32>
    %107 = vector.broadcast %105 : f32 to vector<8x128xf32>
    %108 = arith.select %30, %106, %107 : vector<8x128xi1>, vector<8x128xf32>
    %cst_49 = arith.constant 1.000000e+00 : f32
    %109 = vector.broadcast %cst_49 : f32 to vector<8x128xf32>
    %110 = arith.select %10, %108, %109 : vector<8x128xi1>, vector<8x128xf32>
    %111 = arith.mulf %97, %110 : vector<8x128xf32>
    %c1_50 = arith.constant 1 : index
    %c0_51 = arith.constant 0 : index
    %c0_52 = arith.constant 0 : index
    %112 = vector.load %arg7[%c1_50, %c0_51, %c0_52] : memref<2x8x128xf32, #tpu.memory_space<vmem>>, vector<1x8x128xf32>
    %113 = vector.shape_cast %112 : vector<1x8x128xf32> to vector<8x128xf32>
    %114 = vector.shape_cast %111 : vector<8x128xf32> to vector<1x8x128xf32>
    tpu.vector_store %arg7[%c1_50, %c0_51, %c0_52], %114 {strides = array<i32>} : memref<2x8x128xf32, #tpu.memory_space<vmem>>, vector<1x8x128xf32>,
    return
  }
  func.func @transform_0(%arg0: i32, %arg1: memref<2x2xi32, #tpu.memory_space<smem>>) -> (i32, i32, i32) {
    %c0_i32 = arith.constant 0 : i32
    %c0_i32_0 = arith.constant 0 : i32
    %c0_i32_1 = arith.constant 0 : i32
    return %arg0, %c0_i32, %c0_i32_0 : i32, i32, i32
  }
  func.func @transform_1(%arg0: i32, %arg1: memref<2x2xi32, #tpu.memory_space<smem>>) -> (i32, i32) {
    %c0_i32 = arith.constant 0 : i32
    %c0_i32_0 = arith.constant 0 : i32
    %c0_i32_1 = arith.constant 0 : i32
    return %c0_i32, %c0_i32_0 : i32, i32
  }
  func.func @transform_2(%arg0: i32, %arg1: memref<2x2xi32, #tpu.memory_space<smem>>) -> (i32, i32) {
    %c0_i32 = arith.constant 0 : i32
    %c0_i32_0 = arith.constant 0 : i32
    %c0_i32_1 = arith.constant 0 : i32
    return %c0_i32, %c0_i32_0 : i32, i32
  }
  func.func @transform_3(%arg0: i32, %arg1: memref<2x2xi32, #tpu.memory_space<smem>>) -> (i32, i32) {
    %c0_i32 = arith.constant 0 : i32
    %c0_i32_0 = arith.constant 0 : i32
    %c0_i32_1 = arith.constant 0 : i32
    return %c0_i32, %c0_i32_0 : i32, i32
  }
  func.func @transform_4(%arg0: i32, %arg1: memref<2x2xi32, #tpu.memory_space<smem>>) -> (i32, i32) {
    %c0_i32 = arith.constant 0 : i32
    %c0_i32_0 = arith.constant 0 : i32
    %c0_i32_1 = arith.constant 0 : i32
    return %c0_i32, %c0_i32_0 : i32, i32
  }
  func.func @transform_5(%arg0: i32, %arg1: memref<2x2xi32, #tpu.memory_space<smem>>) -> (i32, i32, i32) {
    %c0_i32 = arith.constant 0 : i32
    %c0_i32_0 = arith.constant 0 : i32
    %c0_i32_1 = arith.constant 0 : i32
    return %arg0, %c0_i32, %c0_i32_0 : i32, i32, i32
  }
}

</mosaic_0001>

<llo_original>
// kernel: tpu_custom_call.1
$region0: #{tpu_custom_call.1}
  #allocation0 [shape = 'u32[]', space=smem, size = 0x4, offset = 0x4, fixed_abs, tag = 'smem constant byte address 0x4 - core index']
  #allocation1 [shape = 'u32[144,128]{1,0:T(1,128)}', space=vmem, size = 0x12000, scoped, tag = 'internal scratch']
  #allocation2 [shape = 's32[1]{0}', space=sflag, size = 0x4, scoped, tag = 'scoped memory for tpu_custom_call.1']
  #allocation3 [shape = 'u8[1024]{0}', space=smem, size = 0x400, scoped, tag = 'prefetched SMEM operand 0']
  %s0 = inlined_call_operand.vmem [shape: s32[2,2], index: 0, kind: input, shape index: {}]
  %s1 = inlined_call_operand.vmem [shape: f32[2,4,256], index: 1, kind: input, shape index: {}]
  %s2 = inlined_call_operand.vmem [shape: f32[32,4], index: 2, kind: input, shape index: {}]
  %s3 = inlined_call_operand.hbm [shape: f32[8,32], index: 3, kind: input, shape index: {}]
  %s4 = inlined_call_operand.vmem [shape: f32[32,128], index: 4, kind: input, shape index: {}]
  %s5 = inlined_call_operand.hbm [shape: f32[128,128], index: 5, kind: input, shape index: {}]
  %s6 = inlined_call_operand.hbm [shape: f32[2,8,128], index: 6, kind: output, shape index: {}]
  %s7 = sld [smem:[#allocation0]]
  $region38: #{tpu_custom_call.1} parent=0
    _
  %s9 = ssub.s32 1, %s7
  %s10 = scalar_select 0, %s9, %s7
  %s11 = sshll.u32 %s0, 4
  %s12 = int_to_ptr.vmem [resolvable:$true] %s11
  %14 = dma.vmem_to_smem %s12, 32, [#allocation3], [#allocation2]
  %15 = dma.done [#allocation2], 32
  %16 = sfence
  $region1: #{tpu_custom_call.1} parent=0
    #allocation4 [shape = 'u8[4096]{0}', space=vmem, size = 0x1000, scoped, tag = 'input window, operand 3, single buffered']
    #allocation5 [shape = 's32[1]{0}', space=sflag, size = 0x4, scoped, tag = 'scoped memory for tpu_custom_call.1']
    #allocation6 [shape = 's32[1]{0}', space=sflag, size = 0x4, scoped, tag = 'scoped memory for tpu_custom_call.1']
    #allocation7 [shape = 'u8[65536]{0}', space=vmem, size = 0x10000, scoped, tag = 'input window, operand 5, single buffered']
    #allocation8 [shape = 's32[1]{0}', space=sflag, size = 0x4, scoped, tag = 'scoped memory for tpu_custom_call.1']
    #allocation9 [shape = 'u8[8192]{0}', space=vmem, size = 0x2000, scoped, tag = 'output window, operand 0, single buffered']
    %17 = vsyncpa [#allocation5], 0
    %18 = vsyncpa [#allocation8], 0
    %19 = vsyncpa [#allocation6], 0
    // Predicated region
    $region2: #{tpu_custom_call.1} parent=1 // pred_check
      _
    $region3: #{tpu_custom_call.1} parent=1 // pred_check_branch
      %21 = sbr.rel (0) target = $region5
    $region4: #{tpu_custom_call.1} parent=1 // pred_region
      _
    $region5: #{tpu_custom_call.1} parent=1 // pred_fallthru
      _
    // Predicated region
    $region6: #{tpu_custom_call.1} parent=1 // pred_check
      _
    $region7: #{tpu_custom_call.1} parent=1 // pred_check_branch
      %23 = sbr.rel (0) target = $region9
    $region8: #{tpu_custom_call.1} parent=1 // pred_region
      _
    $region9: #{tpu_custom_call.1} parent=1 // pred_fallthru
      _
    // Predicated region
    $region10: #{tpu_custom_call.1} parent=1 // pred_check
      _
    $region11: #{tpu_custom_call.1} parent=1 // pred_check_branch
      %25 = sbr.rel (0) target = $region13
    $region12: #{tpu_custom_call.1} parent=1 // pred_region
      %s27 = ssub.s32 128, 128
      %28 = vsyncadd [#allocation5], %s27
      %s30 = sshll.u32 [#allocation4], 4
      %s31 = int_to_ptr.vmem [resolvable:$true] %s30
      %33 = dma.hbm_to_vmem [thread:$0]  %s3, 128, %s31, [#allocation5]
    $region13: #{tpu_custom_call.1} parent=1 // pred_fallthru
      _
    // Predicated region
    $region14: #{tpu_custom_call.1} parent=1 // pred_check
      _
    $region15: #{tpu_custom_call.1} parent=1 // pred_check_branch
      %35 = sbr.rel (0) target = $region17
    $region16: #{tpu_custom_call.1} parent=1 // pred_region
      _
    $region17: #{tpu_custom_call.1} parent=1 // pred_fallthru
      _
    // Predicated region
    $region18: #{tpu_custom_call.1} parent=1 // pred_check
      _
    $region19: #{tpu_custom_call.1} parent=1 // pred_check_branch
      %37 = sbr.rel (0) target = $region21
    $region20: #{tpu_custom_call.1} parent=1 // pred_region
      %s39 = ssub.s32 2048, 2048
      %40 = vsyncadd [#allocation8], %s39
      %s41 = sshll.u32 [#allocation7], 4
      %s42 = int_to_ptr.vmem [resolvable:$true] %s41
      %47 = dma.hbm_to_vmem [thread:$0]  %s5, 2048, %s42, [#allocation8], 128, 128, 8
    $region21: #{tpu_custom_call.1} parent=1 // pred_fallthru
      _
    // Predicated region
    $region22: #{tpu_custom_call.1} parent=1 // pred_check
      _
    $region23: #{tpu_custom_call.1} parent=1 // pred_check_branch
      %49 = sbr.rel (0) target = $region25
    $region24: #{tpu_custom_call.1} parent=1 // pred_region
      %50 = dma.done [#allocation5], 128
    $region25: #{tpu_custom_call.1} parent=1 // pred_fallthru
      _
    // Predicated region
    $region26: #{tpu_custom_call.1} parent=1 // pred_check
      _
    $region27: #{tpu_custom_call.1} parent=1 // pred_check_branch
      %52 = sbr.rel (0) target = $region29
    $region28: #{tpu_custom_call.1} parent=1 // pred_region
      %53 = dma.done [#allocation8], 2048
    $region29: #{tpu_custom_call.1} parent=1 // pred_fallthru
      _
    %s54 = smul.u32 0, 2
    %v55 = vld [vmem:[%s2] sm:$0xff]
    %v56 = vld [vmem:[%s2 + $0x8] sm:$0xff]
    %v57 = vld [vmem:[%s2 + $0x10] sm:$0xff]
    %v58 = vld [vmem:[%s2 + $0x18] sm:$0xff]
    %v59 = vld [vmem:[#allocation4] sm:$0xff]
    %v60 = vld [vmem:[%s4] sm:$0xff]
    %v61 = vld [vmem:[%s4 + $0x8] sm:$0xff]
    %v62 = vld [vmem:[%s4 + $0x10] sm:$0xff]
    %v63 = vld [vmem:[%s4 + $0x18] sm:$0xff]
    %v64 = vld [vmem:[#allocation7] sm:$0xff]
    %v65 = vld [vmem:[#allocation7 + $0x8] sm:$0xff]
    %v66 = vld [vmem:[#allocation7 + $0x10] sm:$0xff]
    %v67 = vld [vmem:[#allocation7 + $0x18] sm:$0xff]
    %v68 = vld [vmem:[#allocation7 + $0x20] sm:$0xff]
    %v69 = vld [vmem:[#allocation7 + $0x28] sm:$0xff]
    %v70 = vld [vmem:[#allocation7 + $0x30] sm:$0xff]
    %v71 = vld [vmem:[#allocation7 + $0x38] sm:$0xff]
    %v72 = vld [vmem:[#allocation7 + $0x40] sm:$0xff]
    %v73 = vld [vmem:[#allocation7 + $0x48] sm:$0xff]
    %v74 = vld [vmem:[#allocation7 + $0x50] sm:$0xff]
    %v75 = vld [vmem:[#allocation7 + $0x58] sm:$0xff]
    %v76 = vld [vmem:[#allocation7 + $0x60] sm:$0xff]
    %v77 = vld [vmem:[#allocation7 + $0x68] sm:$0xff]
    %v78 = vld [vmem:[#allocation7 + $0x70] sm:$0xff]
    %v79 = vld [vmem:[#allocation7 + $0x78] sm:$0xff]
    %v80 = vlaneseq
    %v81 = vand.u32 %v80, 127
    %vm82 = vcmp.ge.s32.totalorder %v81, 9
    %vm83 = vcmp.lt.s32.totalorder %v81, 13
    %vm84 = vmand %vm82, %vm83
    %v85 = vsub.s32 %v81, 9
    %vm86 = vcmp.lt.s32.totalorder %v85, 0
    %v87 = vsub.s32 0, %v85
    %v88 = vsel %vm86, %v87, %v85
    %v89 = vshrl.u32 %v88, 1
    %v90 = vand.u32 %v88, 1
    %v91 = vsub.s32 0, %v90
    %v92 = vsel %vm86, %v91, %v90
    %vm93 = vcmp.ne.s32.totalorder %v92, 0
    %vm94 = vcmp.lt.s32.totalorder %v92, 0
    %vm95 = vmand %vm94, %vm93
    %v96 = vadd.s32 %v92, 2
    %v97 = vsel %vm95, %v96, %v92
    %vm98 = vcmp.eq.s32.totalorder %v97, 0
    %v99 = vld [vmem:[%s1] sm:$0xff]
    %v101 = vcombine.high %v99, %v99
    %vm102 = vcmask 31744
    %v104 = vsel %vm102, %v55, 0
    %v107 = vsel %vm102, %v56, 0
    %v110 = vsel %vm102, %v57, 0
    %v113 = vsel %vm102, %v58, 0
    %vm115 = vcmask 1043456
    %v116 = vsel %vm115, %v99, 0
    %v118 = vsel %vm115, %v101, 0
    %120 = vmatprep.subr.mxu0 %v118
    %121 = vmatpush1.msra.mxu0 %v116
    %122 = vmatprep.subr.mxu0 0.0
    %123 = vmatpush1.msra.mxu0 0.0
    %124 = vmatprep.subr.mxu0 0.0
    %125 = vmatpush1.msra.mxu0 0.0
    %126 = vmatprep.subr.mxu0 0.0
    %127 = vmatpush1.msra.mxu0 0.0
    %128 = vmatprep.subr.mxu0 0.0
    %129 = vmatpush1.msra.mxu0 0.0
    %130 = vmatprep.subr.mxu0 0.0
    %131 = vmatpush1.msra.mxu0 0.0
    %132 = vmatprep.subr.mxu0 0.0
    %133 = vmatpush1.msra.mxu0 0.0
    %134 = vmatprep.subr.mxu0 0.0
    %135 = vmatpush1.msra.mxu0 0.0
    %136 = vmatprep.subr.mxu0 0.0
    %137 = vmatpush1.msra.mxu0 0.0
    %138 = vmatprep.subr.mxu0 0.0
    %139 = vmatpush1.msra.mxu0 0.0
    %140 = vmatprep.subr.mxu0 0.0
    %141 = vmatpush1.msra.mxu0 0.0
    %142 = vmatprep.subr.mxu0 0.0
    %143 = vmatpush1.msra.mxu0 0.0
    %144 = vmatprep.subr.mxu0 0.0
    %145 = vmatpush1.msra.mxu0 0.0
    %146 = vmatprep.subr.mxu0 0.0
    %147 = vmatpush1.msra.mxu0 0.0
    %148 = vmatprep.subr.mxu0 0.0
    %149 = vmatpush1.msra.mxu0 0.0
    %150 = vmatprep.subr.mxu0 0.0
    %151 = vmatpush1.msra.mxu0 0.0
    %152 = vmatprep.subr.mxu0 0.0
    %153 = vmatpush1.msra.mxu0 0.0
    %154 = vmatprep.subr.mxu0 0.0
    %155 = vmatpush1.msra.mxu0 0.0
    %156 = vmatprep.subr.mxu0 0.0
    %157 = vmatpush1.msra.mxu0 0.0
    %158 = vmatprep.subr.mxu0 0.0
    %159 = vmatpush1.msra.mxu0 0.0
    %160 = vmatprep.subr.mxu0 0.0
    %161 = vmatpush1.msra.mxu0 0.0
    %162 = vmatprep.subr.mxu0 0.0
    %163 = vmatpush1.msra.mxu0 0.0
    %164 = vmatprep.subr.mxu0 0.0
    %165 = vmatpush1.msra.mxu0 0.0
    %166 = vmatprep.subr.mxu0 0.0
    %167 = vmatpush1.msra.mxu0 0.0
    %168 = vmatprep.subr.mxu0 0.0
    %169 = vmatpush1.msra.mxu0 0.0
    %170 = vmatprep.subr.mxu0 0.0
    %171 = vmatpush1.msra.mxu0 0.0
    %172 = vmatprep.subr.mxu0 0.0
    %173 = vmatpush1.msra.mxu0 0.0
    %174 = vmatprep.subr.mxu0 0.0
    %175 = vmatpush1.msra.mxu0 0.0
    %176 = vmatprep.subr.mxu0 0.0
    %177 = vmatpush1.msra.mxu0 0.0
    %178 = vmatprep.subr.mxu0 0.0
    %179 = vmatpush1.msra.mxu0 0.0
    %180 = vmatprep.subr.mxu0 0.0
    %181 = vmatpush1.msra.mxu0 0.0
    %182 = vmatprep.subr.mxu0 0.0
    %183 = vmatpush1.msra.mxu0 0.0
    %184 = vmatprep.mubr.f32.mxu0 0.0
    %185 = vmatmul.mubr.f32.gmra.mrb[0].mxu0 %v104
    %v186 = vpop.f32.mrb[0].mxu0
    %v187 = vadd.f32 0.0, %v186
    %v188 = vpop.f32.mrb[0].mxu0
    %v189 = vadd.f32 0.0, %v188
    %190 = vmatprep.mubr.f32.mxu0 0.0
    %191 = vmatmul.mubr.f32.gmra.mrb[0].mxu0 %v107
    %v192 = vpop.f32.mrb[0].mxu0
    %v193 = vadd.f32 0.0, %v192
    %v194 = vpop.f32.mrb[0].mxu0
    %v195 = vadd.f32 0.0, %v194
    %196 = vmatprep.mubr.f32.mxu0 0.0
    %197 = vmatmul.mubr.f32.gmra.mrb[0].mxu0 %v110
    %v198 = vpop.f32.mrb[0].mxu0
    %v199 = vadd.f32 0.0, %v198
    %v200 = vpop.f32.mrb[0].mxu0
    %v201 = vadd.f32 0.0, %v200
    %202 = vmatprep.mubr.f32.mxu0 0.0
    %203 = vmatmul.mubr.f32.gmra.mrb[0].mxu0 %v113
    %v204 = vpop.f32.mrb[0].mxu0
    %v205 = vadd.f32 0.0, %v204
    %v206 = vpop.f32.mrb[0].mxu0
    %v207 = vadd.f32 0.0, %v206
    %208 = vdwg.mxu0
    %v209 = vmax.f32 %v187, 0.0
    %v210 = vmax.f32 %v189, 0.0
    %v211 = vmax.f32 %v193, 0.0
    %v212 = vmax.f32 %v195, 0.0
    %v213 = vmax.f32 %v199, 0.0
    %v214 = vmax.f32 %v201, 0.0
    %v215 = vmax.f32 %v205, 0.0
    %v216 = vmax.f32 %v207, 0.0
    %vm217 = vcmask 261120
    %v219 = vsel %vm217, %v59, 0
    %221 = vmatprep.subr.mxu0 %v210
    %222 = vmatpush1.msra.mxu0 %v209
    %223 = vmatprep.subr.mxu0 %v212
    %224 = vmatpush1.msra.mxu0 %v211
    %225 = vmatprep.subr.mxu0 %v214
    %226 = vmatpush1.msra.mxu0 %v213
    %227 = vmatprep.subr.mxu0 %v216
    %228 = vmatpush1.msra.mxu0 %v215
    %229 = vmatprep.subr.mxu0 0.0
    %230 = vmatpush1.msra.mxu0 0.0
    %231 = vmatprep.subr.mxu0 0.0
    %232 = vmatpush1.msra.mxu0 0.0
    %233 = vmatprep.subr.mxu0 0.0
    %234 = vmatpush1.msra.mxu0 0.0
    %235 = vmatprep.subr.mxu0 0.0
    %236 = vmatpush1.msra.mxu0 0.0
    %237 = vmatprep.subr.mxu0 0.0
    %238 = vmatpush1.msra.mxu0 0.0
    %239 = vmatprep.subr.mxu0 0.0
    %240 = vmatpush1.msra.mxu0 0.0
    %241 = vmatprep.subr.mxu0 0.0
    %242 = vmatpush1.msra.mxu0 0.0
    %243 = vmatprep.subr.mxu0 0.0
    %244 = vmatpush1.msra.mxu0 0.0
    %245 = vmatprep.subr.mxu0 0.0
    %246 = vmatpush1.msra.mxu0 0.0
    %247 = vmatprep.subr.mxu0 0.0
    %248 = vmatpush1.msra.mxu0 0.0
    %249 = vmatprep.subr.mxu0 0.0
    %250 = vmatpush1.msra.mxu0 0.0
    %251 = vmatprep.subr.mxu0 0.0
    %252 = vmatpush1.msra.mxu0 0.0
    %253 = vmatprep.subr.mxu0 0.0
    %254 = vmatpush1.msra.mxu0 0.0
    %255 = vmatprep.subr.mxu0 0.0
    %256 = vmatpush1.msra.mxu0 0.0
    %257 = vmatprep.subr.mxu0 0.0
    %258 = vmatpush1.msra.mxu0 0.0
    %259 = vmatprep.subr.mxu0 0.0
    %260 = vmatpush1.msra.mxu0 0.0
    %261 = vmatprep.subr.mxu0 0.0
    %262 = vmatpush1.msra.mxu0 0.0
    %263 = vmatprep.subr.mxu0 0.0
    %264 = vmatpush1.msra.mxu0 0.0
    %265 = vmatprep.subr.mxu0 0.0
    %266 = vmatpush1.msra.mxu0 0.0
    %267 = vmatprep.subr.mxu0 0.0
    %268 = vmatpush1.msra.mxu0 0.0
    %269 = vmatprep.subr.mxu0 0.0
    %270 = vmatpush1.msra.mxu0 0.0
    %271 = vmatprep.subr.mxu0 0.0
    %272 = vmatpush1.msra.mxu0 0.0
    %273 = vmatprep.subr.mxu0 0.0
    %274 = vmatpush1.msra.mxu0 0.0
    %275 = vmatprep.subr.mxu0 0.0
    %276 = vmatpush1.msra.mxu0 0.0
    %277 = vmatprep.subr.mxu0 0.0
    %278 = vmatpush1.msra.mxu0 0.0
    %279 = vmatprep.subr.mxu0 0.0
    %280 = vmatpush1.msra.mxu0 0.0
    %281 = vmatprep.subr.mxu0 0.0
    %282 = vmatpush1.msra.mxu0 0.0
    %283 = vmatprep.subr.mxu0 0.0
    %284 = vmatpush1.msra.mxu0 0.0
    %285 = vmatprep.mubr.f32.mxu0 0.0
    %286 = vmatmul.mubr.f32.gmra.mrb[0].mxu0 %v219
    %v287 = vpop.f32.mrb[0].mxu0
    %v288 = vadd.f32 0.0, %v287
    %v289 = vpop.f32.mrb[0].mxu0
    %v290 = vadd.f32 0.0, %v289
    %291 = vdwg.mxu0
    %v292 = vmax.f32 %v288, %v290
    %293 = vmax.xlane.f32.xlu0 %v292
    %v294 = vpop.xlane.xlu0 %293
    %v295 = vsub.f32 %v288, %v294
    %v296 = vsub.f32 %v290, %v294
    %v297 = vmul.f32 %v295, 1.442695
    %v298 = vpow.pop %v297
    %v299 = vmul.f32 %v296, 1.442695
    %v300 = vpow.pop %v299
    %v301 = vadd.f32 %v298, %v300
    %302 = vadd.xlane.f32.xlu0 %v301
    %v303 = vpop.xlane.xlu0 %302
    %v304 = vrcp.pop %v303
    %v305 = vmul.f32 %v298, %v304
    %v306 = vmul.f32 %v300, %v304
    %307 = vmatprep.subr.mxu0 %v210
    %308 = vmatpush1.xpose.msra.mxu0 %v209
    %309 = vmatprep.subr.mxu0 %v212
    %310 = vmatpush1.xpose.msra.mxu0 %v211
    %311 = vmatprep.subr.mxu0 %v214
    %312 = vmatpush1.xpose.msra.mxu0 %v213
    %313 = vmatprep.subr.mxu0 %v216
    %314 = vmatpush1.xpose.msra.mxu0 %v215
    %315 = vmatprep.subr.mxu0 0.0
    %316 = vmatpush1.xpose.msra.mxu0 0.0
    %317 = vmatprep.subr.mxu0 0.0
    %318 = vmatpush1.xpose.msra.mxu0 0.0
    %319 = vmatprep.subr.mxu0 0.0
    %320 = vmatpush1.xpose.msra.mxu0 0.0
    %321 = vmatprep.subr.mxu0 0.0
    %322 = vmatpush1.xpose.msra.mxu0 0.0
    %323 = vmatprep.subr.mxu0 0.0
    %324 = vmatpush1.xpose.msra.mxu0 0.0
    %325 = vmatprep.subr.mxu0 0.0
    %326 = vmatpush1.xpose.msra.mxu0 0.0
    %327 = vmatprep.subr.mxu0 0.0
    %328 = vmatpush1.xpose.msra.mxu0 0.0
    %329 = vmatprep.subr.mxu0 0.0
    %330 = vmatpush1.xpose.msra.mxu0 0.0
    %331 = vmatprep.subr.mxu0 0.0
    %332 = vmatpush1.xpose.msra.mxu0 0.0
    %333 = vmatprep.subr.mxu0 0.0
    %334 = vmatpush1.xpose.msra.mxu0 0.0
    %335 = vmatprep.subr.mxu0 0.0
    %336 = vmatpush1.xpose.msra.mxu0 0.0
    %337 = vmatprep.subr.mxu0 0.0
    %338 = vmatpush1.xpose.msra.mxu0 0.0
    %339 = vmatprep.subr.mxu0 0.0
    %340 = vmatpush1.xpose.msra.mxu0 0.0
    %341 = vmatprep.subr.mxu0 0.0
    %342 = vmatpush1.xpose.msra.mxu0 0.0
    %343 = vmatprep.subr.mxu0 0.0
    %344 = vmatpush1.xpose.msra.mxu0 0.0
    %345 = vmatprep.subr.mxu0 0.0
    %346 = vmatpush1.xpose.msra.mxu0 0.0
    %347 = vmatprep.subr.mxu0 0.0
    %348 = vmatpush1.xpose.msra.mxu0 0.0
    %349 = vmatprep.subr.mxu0 0.0
    %350 = vmatpush1.xpose.msra.mxu0 0.0
    %351 = vmatprep.subr.mxu0 0.0
    %352 = vmatpush1.xpose.msra.mxu0 0.0
    %353 = vmatprep.subr.mxu0 0.0
    %354 = vmatpush1.xpose.msra.mxu0 0.0
    %355 = vmatprep.subr.mxu0 0.0
    %356 = vmatpush1.xpose.msra.mxu0 0.0
    %357 = vmatprep.subr.mxu0 0.0
    %358 = vmatpush1.xpose.msra.mxu0 0.0
    %359 = vmatprep.subr.mxu0 0.0
    %360 = vmatpush1.xpose.msra.mxu0 0.0
    %361 = vmatprep.subr.mxu0 0.0
    %362 = vmatpush1.xpose.msra.mxu0 0.0
    %363 = vmatprep.subr.mxu0 0.0
    %364 = vmatpush1.xpose.msra.mxu0 0.0
    %365 = vmatprep.subr.mxu0 0.0
    %366 = vmatpush1.xpose.msra.mxu0 0.0
    %367 = vmatprep.subr.mxu0 0.0
    %368 = vmatpush1.xpose.msra.mxu0 0.0
    %369 = vmatprep.subr.mxu0 0.0
    %370 = vmatpush1.xpose.msra.mxu0 0.0
    %371 = vmatprep.mubr.f32.mxu0 %v306
    %372 = vmatmul.mubr.f32.gmra.mrb[0].mxu0 %v305
    %v373 = vpop.f32.mrb[0].mxu0
    %v374 = vadd.f32 0.0, %v373
    %v375 = vpop.f32.mrb[0].mxu0
    %376 = vdwg.mxu0
    %v378 = vsel %vm217, %v374, 0
    %380 = vmatprep.subr.mxu0 0.0
    %381 = vmatpush1.msra.mxu0 %v60
    %382 = vmatprep.subr.mxu0 0.0
    %383 = vmatpush1.msra.mxu0 %v61
    %384 = vmatprep.subr.mxu0 0.0
    %385 = vmatpush1.msra.mxu0 %v62
    %386 = vmatprep.subr.mxu0 0.0
    %387 = vmatpush1.msra.mxu0 %v63
    %388 = vmatprep.subr.mxu0 0.0
    %389 = vmatpush1.msra.mxu0 0.0
    %390 = vmatprep.subr.mxu0 0.0
    %391 = vmatpush1.msra.mxu0 0.0
    %392 = vmatprep.subr.mxu0 0.0
    %393 = vmatpush1.msra.mxu0 0.0
    %394 = vmatprep.subr.mxu0 0.0
    %395 = vmatpush1.msra.mxu0 0.0
    %396 = vmatprep.subr.mxu0 0.0
    %397 = vmatpush1.msra.mxu0 0.0
    %398 = vmatprep.subr.mxu0 0.0
    %399 = vmatpush1.msra.mxu0 0.0
    %400 = vmatprep.subr.mxu0 0.0
    %401 = vmatpush1.msra.mxu0 0.0
    %402 = vmatprep.subr.mxu0 0.0
    %403 = vmatpush1.msra.mxu0 0.0
    %404 = vmatprep.subr.mxu0 0.0
    %405 = vmatpush1.msra.mxu0 0.0
    %406 = vmatprep.subr.mxu0 0.0
    %407 = vmatpush1.msra.mxu0 0.0
    %408 = vmatprep.subr.mxu0 0.0
    %409 = vmatpush1.msra.mxu0 0.0
    %410 = vmatprep.subr.mxu0 0.0
    %411 = vmatpush1.msra.mxu0 0.0
    %412 = vmatprep.subr.mxu0 0.0
    %413 = vmatpush1.msra.mxu0 0.0
    %414 = vmatprep.subr.mxu0 0.0
    %415 = vmatpush1.msra.mxu0 0.0
    %416 = vmatprep.subr.mxu0 0.0
    %417 = vmatpush1.msra.mxu0 0.0
    %418 = vmatprep.subr.mxu0 0.0
    %419 = vmatpush1.msra.mxu0 0.0
    %420 = vmatprep.subr.mxu0 0.0
    %421 = vmatpush1.msra.mxu0 0.0
    %422 = vmatprep.subr.mxu0 0.0
    %423 = vmatpush1.msra.mxu0 0.0
    %424 = vmatprep.subr.mxu0 0.0
    %425 = vmatpush1.msra.mxu0 0.0
    %426 = vmatprep.subr.mxu0 0.0
    %427 = vmatpush1.msra.mxu0 0.0
    %428 = vmatprep.subr.mxu0 0.0
    %429 = vmatpush1.msra.mxu0 0.0
    %430 = vmatprep.subr.mxu0 0.0
    %431 = vmatpush1.msra.mxu0 0.0
    %432 = vmatprep.subr.mxu0 0.0
    %433 = vmatpush1.msra.mxu0 0.0
    %434 = vmatprep.subr.mxu0 0.0
    %435 = vmatpush1.msra.mxu0 0.0
    %436 = vmatprep.subr.mxu0 0.0
    %437 = vmatpush1.msra.mxu0 0.0
    %438 = vmatprep.subr.mxu0 0.0
    %439 = vmatpush1.msra.mxu0 0.0
    %440 = vmatprep.subr.mxu0 0.0
    %441 = vmatpush1.msra.mxu0 0.0
    %442 = vmatprep.subr.mxu0 0.0
    %443 = vmatpush1.msra.mxu0 0.0
    %444 = vmatprep.mubr.f32.mxu0 0.0
    %445 = vmatmul.mubr.f32.gmra.mrb[0].mxu0 %v378
    %v446 = vpop.f32.mrb[0].mxu0
    %v447 = vadd.f32 0.0, %v446
    %v448 = vpop.f32.mrb[0].mxu0
    %449 = vdwg.mxu0
    %v450 = vsub.f32 0.0, %v447
    %v451 = vmul.f32 %v450, 1.442695
    %v452 = vpow.pop %v451
    %v453 = vadd.f32 %v452, 1.0
    %v454 = vrcp.pop %v453
    %455 = vmatprep.subr.mxu0 0.0
    %456 = vmatpush1.msra.mxu0 %v64
    %457 = vmatprep.subr.mxu0 0.0
    %458 = vmatpush1.msra.mxu0 %v65
    %459 = vmatprep.subr.mxu0 0.0
    %460 = vmatpush1.msra.mxu0 %v66
    %461 = vmatprep.subr.mxu0 0.0
    %462 = vmatpush1.msra.mxu0 %v67
    %463 = vmatprep.subr.mxu0 0.0
    %464 = vmatpush1.msra.mxu0 %v68
    %465 = vmatprep.subr.mxu0 0.0
    %466 = vmatpush1.msra.mxu0 %v69
    %467 = vmatprep.subr.mxu0 0.0
    %468 = vmatpush1.msra.mxu0 %v70
    %469 = vmatprep.subr.mxu0 0.0
    %470 = vmatpush1.msra.mxu0 %v71
    %471 = vmatprep.subr.mxu0 0.0
    %472 = vmatpush1.msra.mxu0 %v72
    %473 = vmatprep.subr.mxu0 0.0
    %474 = vmatpush1.msra.mxu0 %v73
    %475 = vmatprep.subr.mxu0 0.0
    %476 = vmatpush1.msra.mxu0 %v74
    %477 = vmatprep.subr.mxu0 0.0
    %478 = vmatpush1.msra.mxu0 %v75
    %479 = vmatprep.subr.mxu0 0.0
    %480 = vmatpush1.msra.mxu0 %v76
    %481 = vmatprep.subr.mxu0 0.0
    %482 = vmatpush1.msra.mxu0 %v77
    %483 = vmatprep.subr.mxu0 0.0
    %484 = vmatpush1.msra.mxu0 %v78
    %485 = vmatprep.subr.mxu0 0.0
    %486 = vmatpush1.msra.mxu0 %v79
    %487 = vmatprep.subr.mxu0 0.0
    %488 = vmatpush1.msra.mxu0 0.0
    %489 = vmatprep.subr.mxu0 0.0
    %490 = vmatpush1.msra.mxu0 0.0
    %491 = vmatprep.subr.mxu0 0.0
    %492 = vmatpush1.msra.mxu0 0.0
    %493 = vmatprep.subr.mxu0 0.0
    %494 = vmatpush1.msra.mxu0 0.0
    %495 = vmatprep.subr.mxu0 0.0
    %496 = vmatpush1.msra.mxu0 0.0
    %497 = vmatprep.subr.mxu0 0.0
    %498 = vmatpush1.msra.mxu0 0.0
    %499 = vmatprep.subr.mxu0 0.0
    %500 = vmatpush1.msra.mxu0 0.0
    %501 = vmatprep.subr.mxu0 0.0
    %502 = vmatpush1.msra.mxu0 0.0
    %503 = vmatprep.subr.mxu0 0.0
    %504 = vmatpush1.msra.mxu0 0.0
    %505 = vmatprep.subr.mxu0 0.0
    %506 = vmatpush1.msra.mxu0 0.0
    %507 = vmatprep.subr.mxu0 0.0
    %508 = vmatpush1.msra.mxu0 0.0
    %509 = vmatprep.subr.mxu0 0.0
    %510 = vmatpush1.msra.mxu0 0.0
    %511 = vmatprep.subr.mxu0 0.0
    %512 = vmatpush1.msra.mxu0 0.0
    %513 = vmatprep.subr.mxu0 0.0
    %514 = vmatpush1.msra.mxu0 0.0
    %515 = vmatprep.subr.mxu0 0.0
    %516 = vmatpush1.msra.mxu0 0.0
    %517 = vmatprep.subr.mxu0 0.0
    %518 = vmatpush1.msra.mxu0 0.0
    %519 = vmatprep.mubr.f32.mxu0 0.0
    %520 = vmatmul.mubr.f32.gmra.mrb[0].mxu0 %v454
    %v521 = vpop.f32.mrb[0].mxu0
    %v522 = vadd.f32 0.0, %v521
    %v523 = vpop.f32.mrb[0].mxu0
    %524 = vdwg.mxu0
    %s525 = smul.u32 %s54, 128
    %s526 = sld [smem:[#allocation3 + %s525]]
    %s527 = scvt.s32.f32 %s526
    %s528 = sadd.s32 %s525, 1
    %s529 = sld [smem:[#allocation3 + %s528]]
    %s530 = scvt.s32.f32 %s529
    %v531 = vstv %s527
    %v532 = vstv %s530
    %v533 = vsel %vm98, %v531, %v532
    %v534 = vsel %vm84, %v533, 1.0
    %v535 = vmul.f32 %v522, %v534
    %536 = vst [vmem:[#allocation9] sm:$0xff] %v535
    %s537 = scalar_lea.vmem %s1, 8
    %v538 = vld [vmem:[%s537] sm:$0xff]
    %v540 = vcombine.high %v538, %v538
    %v541 = vsel %vm115, %v538, 0
    %v543 = vsel %vm115, %v540, 0
    %545 = vmatprep.subr.mxu0 %v543
    %546 = vmatpush1.msra.mxu0 %v541
    %547 = vmatprep.subr.mxu0 0.0
    %548 = vmatpush1.msra.mxu0 0.0
    %549 = vmatprep.subr.mxu0 0.0
    %550 = vmatpush1.msra.mxu0 0.0
    %551 = vmatprep.subr.mxu0 0.0
    %552 = vmatpush1.msra.mxu0 0.0
    %553 = vmatprep.subr.mxu0 0.0
    %554 = vmatpush1.msra.mxu0 0.0
    %555 = vmatprep.subr.mxu0 0.0
    %556 = vmatpush1.msra.mxu0 0.0
    %557 = vmatprep.subr.mxu0 0.0
    %558 = vmatpush1.msra.mxu0 0.0
    %559 = vmatprep.subr.mxu0 0.0
    %560 = vmatpush1.msra.mxu0 0.0
    %561 = vmatprep.subr.mxu0 0.0
    %562 = vmatpush1.msra.mxu0 0.0
    %563 = vmatprep.subr.mxu0 0.0
    %564 = vmatpush1.msra.mxu0 0.0
    %565 = vmatprep.subr.mxu0 0.0
    %566 = vmatpush1.msra.mxu0 0.0
    %567 = vmatprep.subr.mxu0 0.0
    %568 = vmatpush1.msra.mxu0 0.0
    %569 = vmatprep.subr.mxu0 0.0
    %570 = vmatpush1.msra.mxu0 0.0
    %571 = vmatprep.subr.mxu0 0.0
    %572 = vmatpush1.msra.mxu0 0.0
    %573 = vmatprep.subr.mxu0 0.0
    %574 = vmatpush1.msra.mxu0 0.0
    %575 = vmatprep.subr.mxu0 0.0
    %576 = vmatpush1.msra.mxu0 0.0
    %577 = vmatprep.subr.mxu0 0.0
    %578 = vmatpush1.msra.mxu0 0.0
    %579 = vmatprep.subr.mxu0 0.0
    %580 = vmatpush1.msra.mxu0 0.0
    %581 = vmatprep.subr.mxu0 0.0
    %582 = vmatpush1.msra.mxu0 0.0
    %583 = vmatprep.subr.mxu0 0.0
    %584 = vmatpush1.msra.mxu0 0.0
    %585 = vmatprep.subr.mxu0 0.0
    %586 = vmatpush1.msra.mxu0 0.0
    %587 = vmatprep.subr.mxu0 0.0
    %588 = vmatpush1.msra.mxu0 0.0
    %589 = vmatprep.subr.mxu0 0.0
    %590 = vmatpush1.msra.mxu0 0.0
    %591 = vmatprep.subr.mxu0 0.0
    %592 = vmatpush1.msra.mxu0 0.0
    %593 = vmatprep.subr.mxu0 0.0
    %594 = vmatpush1.msra.mxu0 0.0
    %595 = vmatprep.subr.mxu0 0.0
    %596 = vmatpush1.msra.mxu0 0.0
    %597 = vmatprep.subr.mxu0 0.0
    %598 = vmatpush1.msra.mxu0 0.0
    %599 = vmatprep.subr.mxu0 0.0
    %600 = vmatpush1.msra.mxu0 0.0
    %601 = vmatprep.subr.mxu0 0.0
    %602 = vmatpush1.msra.mxu0 0.0
    %603 = vmatprep.subr.mxu0 0.0
    %604 = vmatpush1.msra.mxu0 0.0
    %605 = vmatprep.subr.mxu0 0.0
    %606 = vmatpush1.msra.mxu0 0.0
    %607 = vmatprep.subr.mxu0 0.0
    %608 = vmatpush1.msra.mxu0 0.0
    %609 = vmatprep.mubr.f32.mxu0 0.0
    %610 = vmatmul.mubr.f32.gmra.mrb[0].mxu0 %v104
    %v611 = vpop.f32.mrb[0].mxu0
    %v612 = vadd.f32 0.0, %v611
    %v613 = vpop.f32.mrb[0].mxu0
    %v614 = vadd.f32 0.0, %v613
    %615 = vmatprep.mubr.f32.mxu0 0.0
    %616 = vmatmul.mubr.f32.gmra.mrb[0].mxu0 %v107
    %v617 = vpop.f32.mrb[0].mxu0
    %v618 = vadd.f32 0.0, %v617
    %v619 = vpop.f32.mrb[0].mxu0
    %v620 = vadd.f32 0.0, %v619
    %621 = vmatprep.mubr.f32.mxu0 0.0
    %622 = vmatmul.mubr.f32.gmra.mrb[0].mxu0 %v110
    %v623 = vpop.f32.mrb[0].mxu0
    %v624 = vadd.f32 0.0, %v623
    %v625 = vpop.f32.mrb[0].mxu0
    %v626 = vadd.f32 0.0, %v625
    %627 = vmatprep.mubr.f32.mxu0 0.0
    %628 = vmatmul.mubr.f32.gmra.mrb[0].mxu0 %v113
    %v629 = vpop.f32.mrb[0].mxu0
    %v630 = vadd.f32 0.0, %v629
    %v631 = vpop.f32.mrb[0].mxu0
    %v632 = vadd.f32 0.0, %v631
    %633 = vdwg.mxu0
    %v634 = vmax.f32 %v612, 0.0
    %v635 = vmax.f32 %v614, 0.0
    %v636 = vmax.f32 %v618, 0.0
    %v637 = vmax.f32 %v620, 0.0
    %v638 = vmax.f32 %v624, 0.0
    %v639 = vmax.f32 %v626, 0.0
    %v640 = vmax.f32 %v630, 0.0
    %v641 = vmax.f32 %v632, 0.0
    %642 = vmatprep.subr.mxu0 %v635
    %643 = vmatpush1.msra.mxu0 %v634
    %644 = vmatprep.subr.mxu0 %v637
    %645 = vmatpush1.msra.mxu0 %v636
    %646 = vmatprep.subr.mxu0 %v639
    %647 = vmatpush1.msra.mxu0 %v638
    %648 = vmatprep.subr.mxu0 %v641
    %649 = vmatpush1.msra.mxu0 %v640
    %650 = vmatprep.subr.mxu0 0.0
    %651 = vmatpush1.msra.mxu0 0.0
    %652 = vmatprep.subr.mxu0 0.0
    %653 = vmatpush1.msra.mxu0 0.0
    %654 = vmatprep.subr.mxu0 0.0
    %655 = vmatpush1.msra.mxu0 0.0
    %656 = vmatprep.subr.mxu0 0.0
    %657 = vmatpush1.msra.mxu0 0.0
    %658 = vmatprep.subr.mxu0 0.0
    %659 = vmatpush1.msra.mxu0 0.0
    %660 = vmatprep.subr.mxu0 0.0
    %661 = vmatpush1.msra.mxu0 0.0
    %662 = vmatprep.subr.mxu0 0.0
    %663 = vmatpush1.msra.mxu0 0.0
    %664 = vmatprep.subr.mxu0 0.0
    %665 = vmatpush1.msra.mxu0 0.0
    %666 = vmatprep.subr.mxu0 0.0
    %667 = vmatpush1.msra.mxu0 0.0
    %668 = vmatprep.subr.mxu0 0.0
    %669 = vmatpush1.msra.mxu0 0.0
    %670 = vmatprep.subr.mxu0 0.0
    %671 = vmatpush1.msra.mxu0 0.0
    %672 = vmatprep.subr.mxu0 0.0
    %673 = vmatpush1.msra.mxu0 0.0
    %674 = vmatprep.subr.mxu0 0.0
    %675 = vmatpush1.msra.mxu0 0.0
    %676 = vmatprep.subr.mxu0 0.0
    %677 = vmatpush1.msra.mxu0 0.0
    %678 = vmatprep.subr.mxu0 0.0
    %679 = vmatpush1.msra.mxu0 0.0
    %680 = vmatprep.subr.mxu0 0.0
    %681 = vmatpush1.msra.mxu0 0.0
    %682 = vmatprep.subr.mxu0 0.0
    %683 = vmatpush1.msra.mxu0 0.0
    %684 = vmatprep.subr.mxu0 0.0
    %685 = vmatpush1.msra.mxu0 0.0
    %686 = vmatprep.subr.mxu0 0.0
    %687 = vmatpush1.msra.mxu0 0.0
    %688 = vmatprep.subr.mxu0 0.0
    %689 = vmatpush1.msra.mxu0 0.0
    %690 = vmatprep.subr.mxu0 0.0
    %691 = vmatpush1.msra.mxu0 0.0
    %692 = vmatprep.subr.mxu0 0.0
    %693 = vmatpush1.msra.mxu0 0.0
    %694 = vmatprep.subr.mxu0 0.0
    %695 = vmatpush1.msra.mxu0 0.0
    %696 = vmatprep.subr.mxu0 0.0
    %697 = vmatpush1.msra.mxu0 0.0
    %698 = vmatprep.subr.mxu0 0.0
    %699 = vmatpush1.msra.mxu0 0.0
    %700 = vmatprep.subr.mxu0 0.0
    %701 = vmatpush1.msra.mxu0 0.0
    %702 = vmatprep.subr.mxu0 0.0
    %703 = vmatpush1.msra.mxu0 0.0
    %704 = vmatprep.subr.mxu0 0.0
    %705 = vmatpush1.msra.mxu0 0.0
    %706 = vmatprep.mubr.f32.mxu0 0.0
    %707 = vmatmul.mubr.f32.gmra.mrb[0].mxu0 %v219
    %v708 = vpop.f32.mrb[0].mxu0
    %v709 = vadd.f32 0.0, %v708
    %v710 = vpop.f32.mrb[0].mxu0
    %v711 = vadd.f32 0.0, %v710
    %712 = vdwg.mxu0
    %v713 = vmax.f32 %v709, %v711
    %714 = vmax.xlane.f32.xlu0 %v713
    %v715 = vpop.xlane.xlu0 %714
    %v716 = vsub.f32 %v709, %v715
    %v717 = vsub.f32 %v711, %v715
    %v718 = vmul.f32 %v716, 1.442695
    %v719 = vpow.pop %v718
    %v720 = vmul.f32 %v717, 1.442695
    %v721 = vpow.pop %v720
    %v722 = vadd.f32 %v719, %v721
    %723 = vadd.xlane.f32.xlu0 %v722
    %v724 = vpop.xlane.xlu0 %723
    %v725 = vrcp.pop %v724
    %v726 = vmul.f32 %v719, %v725
    %v727 = vmul.f32 %v721, %v725
    %728 = vmatprep.subr.mxu0 %v635
    %729 = vmatpush1.xpose.msra.mxu0 %v634
    %730 = vmatprep.subr.mxu0 %v637
    %731 = vmatpush1.xpose.msra.mxu0 %v636
    %732 = vmatprep.subr.mxu0 %v639
    %733 = vmatpush1.xpose.msra.mxu0 %v638
    %734 = vmatprep.subr.mxu0 %v641
    %735 = vmatpush1.xpose.msra.mxu0 %v640
    %736 = vmatprep.subr.mxu0 0.0
    %737 = vmatpush1.xpose.msra.mxu0 0.0
    %738 = vmatprep.subr.mxu0 0.0
    %739 = vmatpush1.xpose.msra.mxu0 0.0
    %740 = vmatprep.subr.mxu0 0.0
    %741 = vmatpush1.xpose.msra.mxu0 0.0
    %742 = vmatprep.subr.mxu0 0.0
    %743 = vmatpush1.xpose.msra.mxu0 0.0
    %744 = vmatprep.subr.mxu0 0.0
    %745 = vmatpush1.xpose.msra.mxu0 0.0
    %746 = vmatprep.subr.mxu0 0.0
    %747 = vmatpush1.xpose.msra.mxu0 0.0
    %748 = vmatprep.subr.mxu0 0.0
    %749 = vmatpush1.xpose.msra.mxu0 0.0
    %750 = vmatprep.subr.mxu0 0.0
    %751 = vmatpush1.xpose.msra.mxu0 0.0
    %752 = vmatprep.subr.mxu0 0.0
    %753 = vmatpush1.xpose.msra.mxu0 0.0
    %754 = vmatprep.subr.mxu0 0.0
    %755 = vmatpush1.xpose.msra.mxu0 0.0
    %756 = vmatprep.subr.mxu0 0.0
    %757 = vmatpush1.xpose.msra.mxu0 0.0
    %758 = vmatprep.subr.mxu0 0.0
    %759 = vmatpush1.xpose.msra.mxu0 0.0
    %760 = vmatprep.subr.mxu0 0.0
    %761 = vmatpush1.xpose.msra.mxu0 0.0
    %762 = vmatprep.subr.mxu0 0.0
    %763 = vmatpush1.xpose.msra.mxu0 0.0
    %764 = vmatprep.subr.mxu0 0.0
    %765 = vmatpush1.xpose.msra.mxu0 0.0
    %766 = vmatprep.subr.mxu0 0.0
    %767 = vmatpush1.xpose.msra.mxu0 0.0
    %768 = vmatprep.subr.mxu0 0.0
    %769 = vmatpush1.xpose.msra.mxu0 0.0
    %770 = vmatprep.subr.mxu0 0.0
    %771 = vmatpush1.xpose.msra.mxu0 0.0
    %772 = vmatprep.subr.mxu0 0.0
    %773 = vmatpush1.xpose.msra.mxu0 0.0
    %774 = vmatprep.subr.mxu0 0.0
    %775 = vmatpush1.xpose.msra.mxu0 0.0
    %776 = vmatprep.subr.mxu0 0.0
    %777 = vmatpush1.xpose.msra.mxu0 0.0
    %778 = vmatprep.subr.mxu0 0.0
    %779 = vmatpush1.xpose.msra.mxu0 0.0
    %780 = vmatprep.subr.mxu0 0.0
    %781 = vmatpush1.xpose.msra.mxu0 0.0
    %782 = vmatprep.subr.mxu0 0.0
    %783 = vmatpush1.xpose.msra.mxu0 0.0
    %784 = vmatprep.subr.mxu0 0.0
    %785 = vmatpush1.xpose.msra.mxu0 0.0
    %786 = vmatprep.subr.mxu0 0.0
    %787 = vmatpush1.xpose.msra.mxu0 0.0
    %788 = vmatprep.subr.mxu0 0.0
    %789 = vmatpush1.xpose.msra.mxu0 0.0
    %790 = vmatprep.subr.mxu0 0.0
    %791 = vmatpush1.xpose.msra.mxu0 0.0
    %792 = vmatprep.mubr.f32.mxu0 %v727
    %793 = vmatmul.mubr.f32.gmra.mrb[0].mxu0 %v726
    %v794 = vpop.f32.mrb[0].mxu0
    %v795 = vadd.f32 0.0, %v794
    %v796 = vpop.f32.mrb[0].mxu0
    %797 = vdwg.mxu0
    %v799 = vsel %vm217, %v795, 0
    %801 = vmatprep.subr.mxu0 0.0
    %802 = vmatpush1.msra.mxu0 %v60
    %803 = vmatprep.subr.mxu0 0.0
    %804 = vmatpush1.msra.mxu0 %v61
    %805 = vmatprep.subr.mxu0 0.0
    %806 = vmatpush1.msra.mxu0 %v62
    %807 = vmatprep.subr.mxu0 0.0
    %808 = vmatpush1.msra.mxu0 %v63
    %809 = vmatprep.subr.mxu0 0.0
    %810 = vmatpush1.msra.mxu0 0.0
    %811 = vmatprep.subr.mxu0 0.0
    %812 = vmatpush1.msra.mxu0 0.0
    %813 = vmatprep.subr.mxu0 0.0
    %814 = vmatpush1.msra.mxu0 0.0
    %815 = vmatprep.subr.mxu0 0.0
    %816 = vmatpush1.msra.mxu0 0.0
    %817 = vmatprep.subr.mxu0 0.0
    %818 = vmatpush1.msra.mxu0 0.0
    %819 = vmatprep.subr.mxu0 0.0
    %820 = vmatpush1.msra.mxu0 0.0
    %821 = vmatprep.subr.mxu0 0.0
    %822 = vmatpush1.msra.mxu0 0.0
    %823 = vmatprep.subr.mxu0 0.0
    %824 = vmatpush1.msra.mxu0 0.0
    %825 = vmatprep.subr.mxu0 0.0
    %826 = vmatpush1.msra.mxu0 0.0
    %827 = vmatprep.subr.mxu0 0.0
    %828 = vmatpush1.msra.mxu0 0.0
    %829 = vmatprep.subr.mxu0 0.0
    %830 = vmatpush1.msra.mxu0 0.0
    %831 = vmatprep.subr.mxu0 0.0
    %832 = vmatpush1.msra.mxu0 0.0
    %833 = vmatprep.subr.mxu0 0.0
    %834 = vmatpush1.msra.mxu0 0.0
    %835 = vmatprep.subr.mxu0 0.0
    %836 = vmatpush1.msra.mxu0 0.0
    %837 = vmatprep.subr.mxu0 0.0
    %838 = vmatpush1.msra.mxu0 0.0
    %839 = vmatprep.subr.mxu0 0.0
    %840 = vmatpush1.msra.mxu0 0.0
    %841 = vmatprep.subr.mxu0 0.0
    %842 = vmatpush1.msra.mxu0 0.0
    %843 = vmatprep.subr.mxu0 0.0
    %844 = vmatpush1.msra.mxu0 0.0
    %845 = vmatprep.subr.mxu0 0.0
    %846 = vmatpush1.msra.mxu0 0.0
    %847 = vmatprep.subr.mxu0 0.0
    %848 = vmatpush1.msra.mxu0 0.0
    %849 = vmatprep.subr.mxu0 0.0
    %850 = vmatpush1.msra.mxu0 0.0
    %851 = vmatprep.subr.mxu0 0.0
    %852 = vmatpush1.msra.mxu0 0.0
    %853 = vmatprep.subr.mxu0 0.0
    %854 = vmatpush1.msra.mxu0 0.0
    %855 = vmatprep.subr.mxu0 0.0
    %856 = vmatpush1.msra.mxu0 0.0
    %857 = vmatprep.subr.mxu0 0.0
    %858 = vmatpush1.msra.mxu0 0.0
    %859 = vmatprep.subr.mxu0 0.0
    %860 = vmatpush1.msra.mxu0 0.0
    %861 = vmatprep.subr.mxu0 0.0
    %862 = vmatpush1.msra.mxu0 0.0
    %863 = vmatprep.subr.mxu0 0.0
    %864 = vmatpush1.msra.mxu0 0.0
    %865 = vmatprep.mubr.f32.mxu0 0.0
    %866 = vmatmul.mubr.f32.gmra.mrb[0].mxu0 %v799
    %v867 = vpop.f32.mrb[0].mxu0
    %v868 = vadd.f32 0.0, %v867
    %v869 = vpop.f32.mrb[0].mxu0
    %870 = vdwg.mxu0
    %v871 = vsub.f32 0.0, %v868
    %v872 = vmul.f32 %v871, 1.442695
    %v873 = vpow.pop %v872
    %v874 = vadd.f32 %v873, 1.0
    %v875 = vrcp.pop %v874
    %876 = vmatprep.subr.mxu0 0.0
    %877 = vmatpush1.msra.mxu0 %v64
    %878 = vmatprep.subr.mxu0 0.0
    %879 = vmatpush1.msra.mxu0 %v65
    %880 = vmatprep.subr.mxu0 0.0
    %881 = vmatpush1.msra.mxu0 %v66
    %882 = vmatprep.subr.mxu0 0.0
    %883 = vmatpush1.msra.mxu0 %v67
    %884 = vmatprep.subr.mxu0 0.0
    %885 = vmatpush1.msra.mxu0 %v68
    %886 = vmatprep.subr.mxu0 0.0
    %887 = vmatpush1.msra.mxu0 %v69
    %888 = vmatprep.subr.mxu0 0.0
    %889 = vmatpush1.msra.mxu0 %v70
    %890 = vmatprep.subr.mxu0 0.0
    %891 = vmatpush1.msra.mxu0 %v71
    %892 = vmatprep.subr.mxu0 0.0
    %893 = vmatpush1.msra.mxu0 %v72
    %894 = vmatprep.subr.mxu0 0.0
    %895 = vmatpush1.msra.mxu0 %v73
    %896 = vmatprep.subr.mxu0 0.0
    %897 = vmatpush1.msra.mxu0 %v74
    %898 = vmatprep.subr.mxu0 0.0
    %899 = vmatpush1.msra.mxu0 %v75
    %900 = vmatprep.subr.mxu0 0.0
    %901 = vmatpush1.msra.mxu0 %v76
    %902 = vmatprep.subr.mxu0 0.0
    %903 = vmatpush1.msra.mxu0 %v77
    %904 = vmatprep.subr.mxu0 0.0
    %905 = vmatpush1.msra.mxu0 %v78
    %906 = vmatprep.subr.mxu0 0.0
    %907 = vmatpush1.msra.mxu0 %v79
    %908 = vmatprep.subr.mxu0 0.0
    %909 = vmatpush1.msra.mxu0 0.0
    %910 = vmatprep.subr.mxu0 0.0
    %911 = vmatpush1.msra.mxu0 0.0
    %912 = vmatprep.subr.mxu0 0.0
    %913 = vmatpush1.msra.mxu0 0.0
    %914 = vmatprep.subr.mxu0 0.0
    %915 = vmatpush1.msra.mxu0 0.0
    %916 = vmatprep.subr.mxu0 0.0
    %917 = vmatpush1.msra.mxu0 0.0
    %918 = vmatprep.subr.mxu0 0.0
    %919 = vmatpush1.msra.mxu0 0.0
    %920 = vmatprep.subr.mxu0 0.0
    %921 = vmatpush1.msra.mxu0 0.0
    %922 = vmatprep.subr.mxu0 0.0
    %923 = vmatpush1.msra.mxu0 0.0
    %924 = vmatprep.subr.mxu0 0.0
    %925 = vmatpush1.msra.mxu0 0.0
    %926 = vmatprep.subr.mxu0 0.0
    %927 = vmatpush1.msra.mxu0 0.0
    %928 = vmatprep.subr.mxu0 0.0
    %929 = vmatpush1.msra.mxu0 0.0
    %930 = vmatprep.subr.mxu0 0.0
    %931 = vmatpush1.msra.mxu0 0.0
    %932 = vmatprep.subr.mxu0 0.0
    %933 = vmatpush1.msra.mxu0 0.0
    %934 = vmatprep.subr.mxu0 0.0
    %935 = vmatpush1.msra.mxu0 0.0
    %936 = vmatprep.subr.mxu0 0.0
    %937 = vmatpush1.msra.mxu0 0.0
    %938 = vmatprep.subr.mxu0 0.0
    %939 = vmatpush1.msra.mxu0 0.0
    %940 = vmatprep.mubr.f32.mxu0 0.0
    %941 = vmatmul.mubr.f32.gmra.mrb[0].mxu0 %v875
    %v942 = vpop.f32.mrb[0].mxu0
    %v943 = vadd.f32 0.0, %v942
    %v944 = vpop.f32.mrb[0].mxu0
    %945 = vdwg.mxu0
    %s946 = sadd.s32 %s54, 1
    %s947 = smul.u32 %s946, 128
    %s948 = sld [smem:[#allocation3 + %s947]]
    %s949 = scvt.s32.f32 %s948
    %s950 = sadd.s32 %s947, 1
    %s951 = sld [smem:[#allocation3 + %s950]]
    %s952 = scvt.s32.f32 %s951
    %v953 = vstv %s949
    %v954 = vstv %s952
    %v955 = vsel %vm98, %v953, %v954
    %v956 = vsel %vm84, %v955, 1.0
    %v957 = vmul.f32 %v943, %v956
    %s958 = scalar_lea.vmem [#allocation9], 8
    %959 = vst [vmem:[%s958] sm:$0xff] %v957
    // Predicated region
    $region30: #{tpu_custom_call.1} parent=1 // pred_check
      _
    $region31: #{tpu_custom_call.1} parent=1 // pred_check_branch
      %961 = sbr.rel (0) target = $region33
    $region32: #{tpu_custom_call.1} parent=1 // pred_region
      %s963 = ssub.s32 256, 256
      %964 = vsyncadd [#allocation6], %s963
      %s965 = sshll.u32 [#allocation9], 4
      %s966 = int_to_ptr.vmem [resolvable:$true] %s965
      %971 = dma.vmem_to_hbm [thread:$0]  %s966, 256, %s6, [#allocation6], 128, 128, 8
    $region33: #{tpu_custom_call.1} parent=1 // pred_fallthru
      _
    // Predicated region
    $region34: #{tpu_custom_call.1} parent=1 // pred_check
      _
    $region35: #{tpu_custom_call.1} parent=1 // pred_check_branch
      %973 = sbr.rel (0) target = $region37
    $region36: #{tpu_custom_call.1} parent=1 // pred_region
      %974 = dma.done [#allocation6], 256
    $region37: #{tpu_custom_call.1} parent=1 // pred_fallthru
      _
    %975 = vsyncpa [#allocation5], 1
    %976 = vsyncpa [#allocation8], 1
    %977 = vsyncpa [#allocation6], 1

</llo_original>
